<compile_context>
chip_gen: v7x
topology: tpu7x:2x2x1
jax: 0.10.0
libtpu: 0.0.40
codegen_flags: <defaults>
</compile_context>

<pallas_src>
import functools

import jax
import jax.numpy as jnp
from jax.experimental import pallas as pl
from jax.experimental.pallas import tpu as pltpu

LANE = 128  # TPU lane width; feature dims are padded to multiples of this.


def _round_up(v, m):
    return ((v + m - 1) // m) * m


# ----------------------------- Pallas kernel ------------------------------- #

def _gnn_fused_kernel(*refs, num_layers):
    """Fused multi-layer GCN forward for ONE batch element (one grid step).

    refs layout:
      refs[0]                   : a_ref  [N, N]            f32   normalized adjacency
      refs[1]                   : x_ref  [N, Fin0_pad]     bf16  node features (padded)
      refs[2 + 2i], refs[3+2i]  : wt_ref [Fin_pad,Fout_pad] bf16, b_ref [1,Fout_pad] f32
      refs[2 + 2L]              : o_ref  [N, FoutL_pad]    f32   output (padded)
    """
    a_ref, x_ref = refs[0], refs[1]
    o_ref = refs[2 + 2 * num_layers]

    a = a_ref[...]          # [N, N] f32, VMEM-resident across the whole forward
    h = x_ref[...]          # [N, F0_pad] bf16

    for i in range(num_layers):
        wt_ref = refs[2 + 2 * i]
        b_ref = refs[3 + 2 * i]

        # Linear: h @ W^T  (bf16 operands, f32 accumulation on the MXU)
        hw = jnp.dot(h, wt_ref[...], preferred_element_type=jnp.float32)
        # gcn_conv: A_hat @ (.)  in f32 for parity with the torch reference
        y = jnp.dot(a, hw, preferred_element_type=jnp.float32)
        # bias add (f32 epilogue on dense lanes)
        y = y + b_ref[...]

        if i < num_layers - 1:
            # ReLU; keep intermediate in vregs, cast to bf16 on dense 128 lanes.
            h = jnp.maximum(y, 0.0).astype(jnp.bfloat16)
            # F.dropout(..., training=False) -> identity
        else:
            o_ref[...] = y.astype(o_ref.dtype)   # no activation on last layer


def gnn_fused(x, a_hat, params, out_channels):
    """Fused forward.

    x:      [B, N, Fin] or [N, Fin] (any float dtype)
    a_hat:  [N, N] f32 normalized adjacency (built once per graph)
    params: list of (W^T [Fin_pad, Fout_pad] bf16, b [1, Fout_pad] f32), pre-padded
    out_channels: true (unpadded) output width; static under jit.
    """
    squeeze = (x.ndim == 2)
    if squeeze:
        x = x[None]
    b_sz, n, fin = x.shape
    num_layers = len(params)
    fin_pad = params[0][0].shape[0]
    fout_pad = params[-1][0].shape[1]

    # Zero-pad features to the padded input width (padded W^T rows are zero too,
    # so this is exact).
    xp = jnp.pad(x.astype(jnp.bfloat16), ((0, 0), (0, 0), (0, fin_pad - fin)))

    inputs = [a_hat.astype(jnp.float32), xp]
    in_specs = [
        pl.BlockSpec((n, n), lambda b: (0, 0)),                 # A_hat: resident
        pl.BlockSpec((None, n, fin_pad), lambda b: (b, 0, 0)),  # x: one batch slab
    ]
    for wt, bias in params:
        inputs.append(wt)
        inputs.append(bias)
        in_specs.append(pl.BlockSpec(wt.shape, lambda b: (0, 0)))
        in_specs.append(pl.BlockSpec(bias.shape, lambda b: (0, 0)))

    out_specs = pl.BlockSpec((None, n, fout_pad), lambda b: (b, 0, 0))

    # Advisory cost estimate so XLA can overlap this small custom call.
    flops = 0
    for wt, _ in params:
        fi, fo = wt.shape
        flops += b_sz * (2 * n * fi * fo + 2 * n * n * fo)
    bytes_accessed = sum(int(v.size) * v.dtype.itemsize for v in inputs)
    bytes_accessed += b_sz * n * fout_pad * 4

    kernel = functools.partial(_gnn_fused_kernel, num_layers=num_layers)
    out = pl.pallas_call(
        kernel,
        out_shape=jax.ShapeDtypeStruct((b_sz, n, fout_pad), jnp.float32),
        grid=(b_sz,),
        in_specs=in_specs,
        out_specs=out_specs,
        compiler_params=pltpu.CompilerParams(
            dimension_semantics=("parallel",)),   # shards batch across TCs on v7x
        cost_estimate=pl.CostEstimate(
            flops=flops, transcendentals=0, bytes_accessed=bytes_accessed),
    )(*inputs)

    out = out[..., :out_channels]                 # drop lane padding
    if squeeze:
        out = out[0]
    return out


# jit so the pad/cast/slice fuse into one XLA computation around the kernel.
gnn_forward = jax.jit(gnn_fused, static_argnames="out_channels")


# ------------------------------- JAX glue ----------------------------------- #
# These run ONCE per graph / at init, not in the per-forward hot path.

def build_gcn_adj(edge_index, num_nodes):
    """Dense symmetric-normalized adjacency with self-loops (gcn_conv).
    Built via one-hot matmuls (no scatter); kept in f32 for numerical parity."""
    src = edge_index[0]
    dst = edge_index[1]
    src_oh = jax.nn.one_hot(src, num_nodes, dtype=jnp.float32)   # [E, N]
    dst_oh = jax.nn.one_hot(dst, num_nodes, dtype=jnp.float32)   # [E, N]
    a = dst_oh.T @ src_oh                                        # A[d, s] = #edges s->d
    a = a + jnp.eye(num_nodes, dtype=jnp.float32)                # add self-loops
    deg = jnp.sum(a, axis=1)
    d_inv_sqrt = jnp.where(deg > 0, 1.0 / jnp.sqrt(deg), 0.0)
    a_hat = d_inv_sqrt[:, None] * a * d_inv_sqrt[None, :]
    return a_hat.astype(jnp.float32)


def xavier_uniform(key, out_f, in_f, gain=1.414):
    bound = gain * jnp.sqrt(6.0 / (in_f + out_f))
    return jax.random.uniform(key, (out_f, in_f), jnp.float32, -bound, bound)


def init_gnn_params(key, in_channels, hidden_channels, out_channels, num_layers=2):
    """Weights pre-transposed to [Fin, Fout], zero-padded to 128-lane multiples,
    stored bf16; biases zero-padded to [1, Fout_pad] f32.  Padding and transpose
    are hoisted out of the per-forward hot path."""
    dims = [in_channels] + [hidden_channels] * (num_layers - 1) + [out_channels]
    dims_pad = [_round_up(d, LANE) for d in dims]
    params = []
    for i in range(num_layers):
        key, sub = jax.random.split(key)
        w = xavier_uniform(sub, dims[i + 1], dims[i])            # [out, in] PyTorch layout
        wt = jnp.transpose(w)                                    # [in, out]
        wt_p = jnp.zeros((dims_pad[i], dims_pad[i + 1]), jnp.float32)
        wt_p = wt_p.at[:dims[i], :dims[i + 1]].set(wt)
        b_p = jnp.zeros((1, dims_pad[i + 1]), jnp.float32)       # zeros_ init, padded
        params.append((wt_p.astype(jnp.bfloat16), b_p))
    return params


# --------------------------------- main ------------------------------------- #

if __name__ == "__main__":
    key = jax.random.PRNGKey(0)

    N = 64            # number of graph nodes
    IN_C = 16
    HIDDEN_C = 32
    OUT_C = 8
    NUM_LAYERS = 2
    BATCH = 2         # independent feature batches over the same graph

    k_feat, k_edge, k_param = jax.random.split(key, 3)

    # Node features [B, N, IN_C]
    x = jax.random.normal(k_feat, (BATCH, N, IN_C), jnp.float32)

    # Deterministic small graph: bidirectional ring + a few random edges.
    idx = jnp.arange(N)
    ring_src = jnp.concatenate([idx, (idx + 1) % N])
    ring_dst = jnp.concatenate([(idx + 1) % N, idx])
    rand_src = jax.random.randint(k_edge, (32,), 0, N)
    rand_dst = jax.random.randint(jax.random.fold_in(k_edge, 1), (32,), 0, N)
    edge_index = jnp.stack(
        [jnp.concatenate([ring_src, rand_src]),
         jnp.concatenate([ring_dst, rand_dst])], axis=0
    ).astype(jnp.int32)                                          # [2, E]

    params = init_gnn_params(k_param, IN_C, HIDDEN_C, OUT_C, NUM_LAYERS)

    # A_hat built once per graph (use_mp=True); for use_mp=False pass eye(N).
    a_hat = build_gcn_adj(edge_index, N)

    out = gnn_forward(x, a_hat, params, out_channels=OUT_C)
    out = jax.block_until_ready(out)
    assert out.shape == (BATCH, N, OUT_C) and out.dtype == jnp.float32

    print("KERNEL_OK")
</pallas_src>

<mosaic_0001>
module attributes {stable_mosaic.version = 11 : i64} {
  func.func @_gnn_fused_kernel(%arg0: i32, %arg1: memref<64x64xf32, #tpu.memory_space<vmem>>, %arg2: memref<1x64x128xbf16, #tpu.memory_space<vmem>>, %arg3: memref<128x128xbf16, #tpu.memory_space<vmem>>, %arg4: memref<1x128xf32, #tpu.memory_space<vmem>>, %arg5: memref<128x128xbf16, #tpu.memory_space<vmem>>, %arg6: memref<1x128xf32, #tpu.memory_space<vmem>>, %arg7: memref<1x64x128xf32, #tpu.memory_space<vmem>>) attributes {dimension_semantics = [#tpu.dimension_semantics<parallel>], iteration_bounds = array<i64: 2>, scalar_prefetch = 0 : i64, scratch_operands = 0 : i64, tpu.core_type = #tpu.core_type<tc>, window_params = [{pipeline_mode = #tpu.pipeline_mode<synchronous>, transform_indices = @transform_0, window_bounds = array<i64: 64, 64>}, {transform_indices = @transform_1, window_bounds = array<i64: 1, 64, 128>}, {pipeline_mode = #tpu.pipeline_mode<synchronous>, transform_indices = @transform_2, window_bounds = array<i64: 128, 128>}, {pipeline_mode = #tpu.pipeline_mode<synchronous>, transform_indices = @transform_3, window_bounds = array<i64: 1, 128>}, {pipeline_mode = #tpu.pipeline_mode<synchronous>, transform_indices = @transform_4, window_bounds = array<i64: 128, 128>}, {pipeline_mode = #tpu.pipeline_mode<synchronous>, transform_indices = @transform_5, window_bounds = array<i64: 1, 128>}, {transform_indices = @transform_6, window_bounds = array<i64: 1, 64, 128>}]} {
    %c0 = arith.constant 0 : index
    %c0_0 = arith.constant 0 : index
    %0 = vector.load %arg1[%c0, %c0_0] : memref<64x64xf32, #tpu.memory_space<vmem>>, vector<64x64xf32>
    %c0_1 = arith.constant 0 : index
    %c0_2 = arith.constant 0 : index
    %c0_3 = arith.constant 0 : index
    %1 = vector.load %arg2[%c0_1, %c0_2, %c0_3] : memref<1x64x128xbf16, #tpu.memory_space<vmem>>, vector<1x64x128xbf16>
    %2 = vector.shape_cast %1 : vector<1x64x128xbf16> to vector<64x128xbf16>
    %c0_4 = arith.constant 0 : index
    %c0_5 = arith.constant 0 : index
    %3 = vector.load %arg3[%c0_4, %c0_5] : memref<128x128xbf16, #tpu.memory_space<vmem>>, vector<128x128xbf16>
    %cst = arith.constant dense<0.000000e+00> : vector<64x128xf32>
    %4 = tpu.matmul %2, %3, %cst {dimension_numbers = #tpu.dot_dimension_numbers<[1], [0], [0], [1], [0, 0, 1, 1], [], []>} : vector<64x128xbf16>, vector<128x128xbf16>, vector<64x128xf32> -> vector<64x128xf32>
    %cst_6 = arith.constant dense<0.000000e+00> : vector<64x128xf32>
    %5 = tpu.matmul %0, %4, %cst_6 {dimension_numbers = #tpu.dot_dimension_numbers<[1], [0], [0], [1], [0, 0, 1, 1], [], []>} : vector<64x64xf32>, vector<64x128xf32>, vector<64x128xf32> -> vector<64x128xf32>
    %c0_7 = arith.constant 0 : index
    %c0_8 = arith.constant 0 : index
    %6 = vector.load %arg4[%c0_7, %c0_8] : memref<1x128xf32, #tpu.memory_space<vmem>>, vector<1x128xf32>
    %7 = vector.broadcast %6 : vector<1x128xf32> to vector<64x128xf32>
    %8 = arith.addf %5, %7 : vector<64x128xf32>
    %cst_9 = arith.constant 0.000000e+00 : f32
    %9 = vector.broadcast %cst_9 : f32 to vector<64x128xf32>
    %10 = arith.maximumf %8, %9 : vector<64x128xf32>
    %11 = arith.truncf %10 : vector<64x128xf32> to vector<64x128xbf16>
    %c0_10 = arith.constant 0 : index
    %c0_11 = arith.constant 0 : index
    %12 = vector.load %arg5[%c0_10, %c0_11] : memref<128x128xbf16, #tpu.memory_space<vmem>>, vector<128x128xbf16>
    %cst_12 = arith.constant dense<0.000000e+00> : vector<64x128xf32>
    %13 = tpu.matmul %11, %12, %cst_12 {dimension_numbers = #tpu.dot_dimension_numbers<[1], [0], [0], [1], [0, 0, 1, 1], [], []>} : vector<64x128xbf16>, vector<128x128xbf16>, vector<64x128xf32> -> vector<64x128xf32>
    %cst_13 = arith.constant dense<0.000000e+00> : vector<64x128xf32>
    %14 = tpu.matmul %0, %13, %cst_13 {dimension_numbers = #tpu.dot_dimension_numbers<[1], [0], [0], [1], [0, 0, 1, 1], [], []>} : vector<64x64xf32>, vector<64x128xf32>, vector<64x128xf32> -> vector<64x128xf32>
    %c0_14 = arith.constant 0 : index
    %c0_15 = arith.constant 0 : index
    %15 = vector.load %arg6[%c0_14, %c0_15] : memref<1x128xf32, #tpu.memory_space<vmem>>, vector<1x128xf32>
    %16 = vector.broadcast %15 : vector<1x128xf32> to vector<64x128xf32>
    %17 = arith.addf %14, %16 : vector<64x128xf32>
    %c0_16 = arith.constant 0 : index
    %c0_17 = arith.constant 0 : index
    %c0_18 = arith.constant 0 : index
    %18 = vector.load %arg7[%c0_16, %c0_17, %c0_18] : memref<1x64x128xf32, #tpu.memory_space<vmem>>, vector<1x64x128xf32>
    %19 = vector.shape_cast %18 : vector<1x64x128xf32> to vector<64x128xf32>
    %20 = vector.shape_cast %17 : vector<64x128xf32> to vector<1x64x128xf32>
    tpu.vector_store %arg7[%c0_16, %c0_17, %c0_18], %20 {strides = array<i32>} : memref<1x64x128xf32, #tpu.memory_space<vmem>>, vector<1x64x128xf32>,
    return
  }
  func.func @transform_0(%arg0: i32) -> (i32, i32) {
    %c0_i32 = arith.constant 0 : i32
    %c0_i32_0 = arith.constant 0 : i32
    %c0_i32_1 = arith.constant 0 : i32
    return %c0_i32, %c0_i32_0 : i32, i32
  }
  func.func @transform_1(%arg0: i32) -> (i32, i32, i32) {
    %c0_i32 = arith.constant 0 : i32
    %c0_i32_0 = arith.constant 0 : i32
    %c0_i32_1 = arith.constant 0 : i32
    return %arg0, %c0_i32, %c0_i32_0 : i32, i32, i32
  }
  func.func @transform_2(%arg0: i32) -> (i32, i32) {
    %c0_i32 = arith.constant 0 : i32
    %c0_i32_0 = arith.constant 0 : i32
    %c0_i32_1 = arith.constant 0 : i32
    return %c0_i32, %c0_i32_0 : i32, i32
  }
  func.func @transform_3(%arg0: i32) -> (i32, i32) {
    %c0_i32 = arith.constant 0 : i32
    %c0_i32_0 = arith.constant 0 : i32
    %c0_i32_1 = arith.constant 0 : i32
    return %c0_i32, %c0_i32_0 : i32, i32
  }
  func.func @transform_4(%arg0: i32) -> (i32, i32) {
    %c0_i32 = arith.constant 0 : i32
    %c0_i32_0 = arith.constant 0 : i32
    %c0_i32_1 = arith.constant 0 : i32
    return %c0_i32, %c0_i32_0 : i32, i32
  }
  func.func @transform_5(%arg0: i32) -> (i32, i32) {
    %c0_i32 = arith.constant 0 : i32
    %c0_i32_0 = arith.constant 0 : i32
    %c0_i32_1 = arith.constant 0 : i32
    return %c0_i32, %c0_i32_0 : i32, i32
  }
  func.func @transform_6(%arg0: i32) -> (i32, i32, i32) {
    %c0_i32 = arith.constant 0 : i32
    %c0_i32_0 = arith.constant 0 : i32
    %c0_i32_1 = arith.constant 0 : i32
    return %arg0, %c0_i32, %c0_i32_0 : i32, i32, i32
  }
}

</mosaic_0001>

<llo_original>
// kernel: gnn_fused.1
$region0: #{gnn_fused.1}
  #allocation0 [shape = 'u32[]', space=smem, size = 0x4, offset = 0x4, fixed_abs, tag = 'smem constant byte address 0x4 - core index']
  #allocation1 [shape = 'u32[144,128]{1,0:T(1,128)}', space=vmem, size = 0x12000, scoped, tag = 'internal scratch']
  %s0 = inlined_call_operand.vmem [shape: f32[64,64], index: 0, kind: input, shape index: {}]
  %s1 = inlined_call_operand.vmem [shape: bf16[2,64,128], index: 1, kind: input, shape index: {}]
  %s2 = inlined_call_operand.vmem [shape: bf16[128,128], index: 2, kind: input, shape index: {}]
  %s3 = inlined_call_operand.vmem [shape: f32[1,128], index: 3, kind: input, shape index: {}]
  %s4 = inlined_call_operand.vmem [shape: bf16[128,128], index: 4, kind: input, shape index: {}]
  %s5 = inlined_call_operand.vmem [shape: f32[1,128], index: 5, kind: input, shape index: {}]
  %s6 = inlined_call_operand.vmem [shape: f32[2,64,128], index: 6, kind: output, shape index: {}]
  %s7 = sld [smem:[#allocation0]]
  $region57: #{gnn_fused.1} parent=0
    _
  %s9 = ssub.s32 1, %s7
  %s10 = scalar_select 0, %s9, %s7
  loop: start=0, step=1, limit=4
  $region2: #{gnn_fused.1} parent=0 // loop_pre_header
    _
  $region3: #{gnn_fused.1} parent=0 // loop_header
    %s12 = sphi 0, %s16
    %p13 = scmp.ge.s32.totalorder %s12, 4
    %s20 = sphi 0, %s20
    %s22 = sphi 0, %s20
    %s23 = sphi 0, %s22
    %s37 = sphi 0, %s23
    %s43 = sphi 0, %s45
    %s46 = sphi 0, %s43
    %s47 = sphi 0, %s46
    %s63 = sphi 0, %s47
    %s67 = sphi 0, %s67
    %s69 = sphi 0, %s67
    %s70 = sphi 0, %s69
    %s84 = sphi 0, %s70
    %s88 = sphi 0, %s88
    %s90 = sphi 0, %s88
    %s91 = sphi 0, %s90
    %s105 = sphi 0, %s91
    %s109 = sphi 0, %s109
    %s111 = sphi 0, %s109
    %s112 = sphi 0, %s111
    %s126 = sphi 0, %s112
    %s130 = sphi 0, %s130
    %s132 = sphi 0, %s130
    %s133 = sphi 0, %s132
    %s147 = sphi 0, %s133
    %s153 = sphi 0, %s155
    %s156 = sphi 0, %s153
    %s157 = sphi 0, %s156
    %s173 = sphi 0, %s157
  $region4: #{gnn_fused.1} parent=0 // loop_header_branch
    %15 = sbr.rel (%p13) target = $region8
  $region5: #{gnn_fused.1} parent=0 // loop_body
    %s17 = ssub.s32 %s12, 1
    %s18 = ssub.s32 %s12, 2
    %s19 = sadd.s32 %s12, 1
    %s21 = sadd.s32 %s20, 1
    %p24 = scmp.eq.s32.totalorder %s12, 1
    %p25 = scmp.ne.s32.totalorder %s20, %s22
    %p26 = scmp.eq.s32.totalorder %s12, 0
    %p27 = por %p25, %p26
    %p28 = scmp.ne.s32.totalorder %s20, %s22
    %p29 = scmp.eq.s32.totalorder %s17, 1
    %p30 = por %p28, %p29
    %p31 = scmp.ne.s32.totalorder %s22, %s23
    %p32 = scmp.eq.s32.totalorder %s17, 0
    %p33 = por %p31, %p32
    %p34 = scmp.ne.s32.totalorder %s22, %s23
    %p35 = scmp.eq.s32.totalorder %s18, 1
    %p36 = por %p34, %p35
    %p38 = scmp.ne.s32.totalorder %s23, %s37
    %p39 = scmp.eq.s32.totalorder %s18, 0
    %p40 = por %p38, %p39
    %s41 = ssub.s32 %s12, %s19
    %p42 = scmp.eq.s32.totalorder %s41, 0
    %s44 = sadd.s32 %s43, 1
    %s45 = scalar_select %p42, %s43, %s44
    %p48 = pneg %p42
    %p49 = scmp.eq.s32.totalorder %s12, 1
    %p50 = por %p48, %p49
    %p51 = scmp.ne.s32.totalorder %s43, %s46
    %p52 = scmp.eq.s32.totalorder %s12, 0
    %p53 = por %p51, %p52
    %p54 = scmp.ne.s32.totalorder %s43, %s46
    %p55 = scmp.eq.s32.totalorder %s17, 1
    %p56 = por %p54, %p55
    %p57 = scmp.ne.s32.totalorder %s46, %s47
    %p58 = scmp.eq.s32.totalorder %s17, 0
    %p59 = por %p57, %p58
    %p60 = scmp.ne.s32.totalorder %s46, %s47
    %p61 = scmp.eq.s32.totalorder %s18, 1
    %p62 = por %p60, %p61
    %p64 = scmp.ne.s32.totalorder %s47, %s63
    %p65 = scmp.eq.s32.totalorder %s18, 0
    %p66 = por %p64, %p65
    %s68 = sadd.s32 %s67, 1
    %p71 = scmp.eq.s32.totalorder %s12, 1
    %p72 = scmp.ne.s32.totalorder %s67, %s69
    %p73 = scmp.eq.s32.totalorder %s12, 0
    %p74 = por %p72, %p73
    %p75 = scmp.ne.s32.totalorder %s67, %s69
    %p76 = scmp.eq.s32.totalorder %s17, 1
    %p77 = por %p75, %p76
    %p78 = scmp.ne.s32.totalorder %s69, %s70
    %p79 = scmp.eq.s32.totalorder %s17, 0
    %p80 = por %p78, %p79
    %p81 = scmp.ne.s32.totalorder %s69, %s70
    %p82 = scmp.eq.s32.totalorder %s18, 1
    %p83 = por %p81, %p82
    %p85 = scmp.ne.s32.totalorder %s70, %s84
    %p86 = scmp.eq.s32.totalorder %s18, 0
    %p87 = por %p85, %p86
    %s89 = sadd.s32 %s88, 1
    %p92 = scmp.eq.s32.totalorder %s12, 1
    %p93 = scmp.ne.s32.totalorder %s88, %s90
    %p94 = scmp.eq.s32.totalorder %s12, 0
    %p95 = por %p93, %p94
    %p96 = scmp.ne.s32.totalorder %s88, %s90
    %p97 = scmp.eq.s32.totalorder %s17, 1
    %p98 = por %p96, %p97
    %p99 = scmp.ne.s32.totalorder %s90, %s91
    %p100 = scmp.eq.s32.totalorder %s17, 0
    %p101 = por %p99, %p100
    %p102 = scmp.ne.s32.totalorder %s90, %s91
    %p103 = scmp.eq.s32.totalorder %s18, 1
    %p104 = por %p102, %p103
    %p106 = scmp.ne.s32.totalorder %s91, %s105
    %p107 = scmp.eq.s32.totalorder %s18, 0
    %p108 = por %p106, %p107
    %s110 = sadd.s32 %s109, 1
    %p113 = scmp.eq.s32.totalorder %s12, 1
    %p114 = scmp.ne.s32.totalorder %s109, %s111
    %p115 = scmp.eq.s32.totalorder %s12, 0
    %p116 = por %p114, %p115
    %p117 = scmp.ne.s32.totalorder %s109, %s111
    %p118 = scmp.eq.s32.totalorder %s17, 1
    %p119 = por %p117, %p118
    %p120 = scmp.ne.s32.totalorder %s111, %s112
    %p121 = scmp.eq.s32.totalorder %s17, 0
    %p122 = por %p120, %p121
    %p123 = scmp.ne.s32.totalorder %s111, %s112
    %p124 = scmp.eq.s32.totalorder %s18, 1
    %p125 = por %p123, %p124
    %p127 = scmp.ne.s32.totalorder %s112, %s126
    %p128 = scmp.eq.s32.totalorder %s18, 0
    %p129 = por %p127, %p128
    %s131 = sadd.s32 %s130, 1
    %p134 = scmp.eq.s32.totalorder %s12, 1
    %p135 = scmp.ne.s32.totalorder %s130, %s132
    %p136 = scmp.eq.s32.totalorder %s12, 0
    %p137 = por %p135, %p136
    %p138 = scmp.ne.s32.totalorder %s130, %s132
    %p139 = scmp.eq.s32.totalorder %s17, 1
    %p140 = por %p138, %p139
    %p141 = scmp.ne.s32.totalorder %s132, %s133
    %p142 = scmp.eq.s32.totalorder %s17, 0
    %p143 = por %p141, %p142
    %p144 = scmp.ne.s32.totalorder %s132, %s133
    %p145 = scmp.eq.s32.totalorder %s18, 1
    %p146 = por %p144, %p145
    %p148 = scmp.ne.s32.totalorder %s133, %s147
    %p149 = scmp.eq.s32.totalorder %s18, 0
    %p150 = por %p148, %p149
    %s151 = ssub.s32 %s12, %s19
    %p152 = scmp.eq.s32.totalorder %s151, 0
    %s154 = sadd.s32 %s153, 1
    %s155 = scalar_select %p152, %s153, %s154
    %p158 = pneg %p152
    %p159 = scmp.eq.s32.totalorder %s12, 1
    %p160 = por %p158, %p159
    %p161 = scmp.ne.s32.totalorder %s153, %s156
    %p162 = scmp.eq.s32.totalorder %s12, 0
    %p163 = por %p161, %p162
    %p164 = scmp.ne.s32.totalorder %s153, %s156
    %p165 = scmp.eq.s32.totalorder %s17, 1
    %p166 = por %p164, %p165
    %p167 = scmp.ne.s32.totalorder %s156, %s157
    %p168 = scmp.eq.s32.totalorder %s17, 0
    %p169 = por %p167, %p168
    %p170 = scmp.ne.s32.totalorder %s156, %s157
    %p171 = scmp.eq.s32.totalorder %s18, 1
    %p172 = por %p170, %p171
    %p174 = scmp.ne.s32.totalorder %s157, %s173
    %p175 = scmp.eq.s32.totalorder %s18, 0
    %p176 = por %p174, %p175
    %p177 = scmp.le.s32.totalorder 1, %s12
    %p178 = scmp.lt.s32.totalorder %s12, 3
    %p179 = pnand %p177, %p178
    %p180 = pneg %p179
    // Predicated region
    $region9: #{gnn_fused.1} parent=5 // pred_check
      _
    $region10: #{gnn_fused.1} parent=5 // pred_check_branch
      %182 = sbr.rel (%p179) target = $region12
    $region11: #{gnn_fused.1} parent=5 // pred_region
      %s183 = ssub.s32 %s12, 1
      // Predicated region
      $region13: #{gnn_fused.1} parent=11 // pred_check
        %p184 = pneg %p33
      $region14: #{gnn_fused.1} parent=11 // pred_check_branch
        %186 = sbr.rel (%p184) target = $region16
      $region15: #{gnn_fused.1} parent=11 // pred_region
        _
      $region16: #{gnn_fused.1} parent=11 // pred_fallthru
        _
      // Predicated region
      $region17: #{gnn_fused.1} parent=11 // pred_check
        %p187 = pneg %p80
      $region18: #{gnn_fused.1} parent=11 // pred_check_branch
        %189 = sbr.rel (%p187) target = $region20
      $region19: #{gnn_fused.1} parent=11 // pred_region
        _
      $region20: #{gnn_fused.1} parent=11 // pred_fallthru
        _
      // Predicated region
      $region21: #{gnn_fused.1} parent=11 // pred_check
        %p190 = pneg %p101
      $region22: #{gnn_fused.1} parent=11 // pred_check_branch
        %192 = sbr.rel (%p190) target = $region24
      $region23: #{gnn_fused.1} parent=11 // pred_region
        _
      $region24: #{gnn_fused.1} parent=11 // pred_fallthru
        _
      // Predicated region
      $region25: #{gnn_fused.1} parent=11 // pred_check
        %p193 = pneg %p122
      $region26: #{gnn_fused.1} parent=11 // pred_check_branch
        %195 = sbr.rel (%p193) target = $region28
      $region27: #{gnn_fused.1} parent=11 // pred_region
        _
      $region28: #{gnn_fused.1} parent=11 // pred_fallthru
        _
      // Predicated region
      $region29: #{gnn_fused.1} parent=11 // pred_check
        %p196 = pneg %p143
      $region30: #{gnn_fused.1} parent=11 // pred_check_branch
        %198 = sbr.rel (%p196) target = $region32
      $region31: #{gnn_fused.1} parent=11 // pred_region
        _
      $region32: #{gnn_fused.1} parent=11 // pred_fallthru
        _
    $region12: #{gnn_fused.1} parent=5 // pred_fallthru
      _
    %p199 = scmp.lt.s32.totalorder %s12, 2
    // Predicated region
    $region33: #{gnn_fused.1} parent=5 // pred_check
      %p200 = pneg %p199
    $region34: #{gnn_fused.1} parent=5 // pred_check_branch
      %202 = sbr.rel (%p200) target = $region36
    $region35: #{gnn_fused.1} parent=5 // pred_region
      // Predicated region
      $region37: #{gnn_fused.1} parent=35 // pred_check
        %p203 = pneg %p53
      $region38: #{gnn_fused.1} parent=35 // pred_check_branch
        %205 = sbr.rel (%p203) target = $region40
      $region39: #{gnn_fused.1} parent=35 // pred_region
        %p206 = scmp.lt.s32.totalorder %s12, 1
        %s207 = scalar_select %p206, %s12, 1
        %s208 = smul.addr %s207, 8
        %s209 = smul.addr %s208, 4
        %s210 = scalar_lea.vmem %s1, %s209
      $region40: #{gnn_fused.1} parent=35 // pred_fallthru
        _
    $region36: #{gnn_fused.1} parent=5 // pred_fallthru
      _
    %p211 = scmp.le.s32.totalorder 1, %s12
    %p212 = scmp.lt.s32.totalorder %s12, 3
    %p213 = pnand %p211, %p212
    %p214 = pneg %p213
    // Predicated region
    $region41: #{gnn_fused.1} parent=5 // pred_check
      _
    $region42: #{gnn_fused.1} parent=5 // pred_check_branch
      %216 = sbr.rel (%p213) target = $region44
    $region43: #{gnn_fused.1} parent=5 // pred_region
      %s217 = ssub.s32 %s12, 1
      %p218 = pneg %p33
      %p219 = pneg %p30
      %p220 = scmp.lt.s32.totalorder %s17, 1
      %s221 = scalar_select %p220, %s17, 1
      %s222 = smul.addr %s221, 8
      %s223 = smul.addr %s222, 4
      %s224 = scalar_lea.vmem %s1, %s223
      %p225 = pneg %p59
      %p226 = pneg %p56
      %p227 = pneg %p80
      %p228 = pneg %p77
      %p229 = pneg %p101
      %p230 = pneg %p98
      %p231 = pneg %p122
      %p232 = pneg %p119
      %p233 = pneg %p143
      %p234 = pneg %p140
      %p235 = pneg %p169
      %p236 = pneg %p166
      %p237 = scmp.lt.s32.totalorder %s17, 1
      %s238 = scalar_select %p237, %s17, 1
      %s239 = smul.addr %s238, 8
      %s240 = smul.addr %s239, 8
      %s241 = scalar_lea.vmem %s6, %s240
      %p242 = scmp.lt.s32.totalorder %s17, 1
      %s243 = scalar_select %p242, %s17, 1
      %s244 = smul.addr %s243, 8
      %s245 = smul.addr %s244, 4
      %s246 = scalar_lea.vmem %s1, %s245
      %p247 = scmp.lt.s32.totalorder %s17, 1
      %s248 = scalar_select %p247, %s17, 1
      %s249 = smul.addr %s248, 8
      %s250 = smul.addr %s249, 8
      %s251 = scalar_lea.vmem %s6, %s250
      %v253 = vld [vmem:[%s0] sm:$0xff]
      %v254 = vld [vmem:[%s0 + $0x8] sm:$0xff]
      %v255 = vld [vmem:[%s0 + $0x10] sm:$0xff]
      %v256 = vld [vmem:[%s0 + $0x18] sm:$0xff]
      %v257 = vld [vmem:[%s0 + $0x20] sm:$0xff]
      %v258 = vld [vmem:[%s0 + $0x28] sm:$0xff]
      %v259 = vld [vmem:[%s0 + $0x30] sm:$0xff]
      %v260 = vld [vmem:[%s0 + $0x38] sm:$0xff]
      %v261 = vld [vmem:[%s246] sm:$0xf]
      %v262 = vld [vmem:[%s246 + $0x4] sm:$0xf]
      %v263 = vld [vmem:[%s246 + $0x8] sm:$0xf]
      %v264 = vld [vmem:[%s246 + $0xc] sm:$0xf]
      %v265 = vld [vmem:[%s246 + $0x10] sm:$0xf]
      %v266 = vld [vmem:[%s246 + $0x14] sm:$0xf]
      %v267 = vld [vmem:[%s246 + $0x18] sm:$0xf]
      %v268 = vld [vmem:[%s246 + $0x1c] sm:$0xf]
      %v269 = vld [vmem:[%s2] sm:$0xf]
      %v270 = vld [vmem:[%s2 + $0x4] sm:$0xf]
      %v271 = vld [vmem:[%s2 + $0x8] sm:$0xf]
      %v272 = vld [vmem:[%s2 + $0xc] sm:$0xf]
      %v273 = vld [vmem:[%s2 + $0x10] sm:$0xf]
      %v274 = vld [vmem:[%s2 + $0x14] sm:$0xf]
      %v275 = vld [vmem:[%s2 + $0x18] sm:$0xf]
      %v276 = vld [vmem:[%s2 + $0x1c] sm:$0xf]
      %v277 = vld [vmem:[%s2 + $0x20] sm:$0xf]
      %v278 = vld [vmem:[%s2 + $0x24] sm:$0xf]
      %v279 = vld [vmem:[%s2 + $0x28] sm:$0xf]
      %v280 = vld [vmem:[%s2 + $0x2c] sm:$0xf]
      %v281 = vld [vmem:[%s2 + $0x30] sm:$0xf]
      %v282 = vld [vmem:[%s2 + $0x34] sm:$0xf]
      %v283 = vld [vmem:[%s2 + $0x38] sm:$0xf]
      %v284 = vld [vmem:[%s2 + $0x3c] sm:$0xf]
      %v293 = vunpack.c.l.b16 %v261
      %v294 = vunpack.c.l.b16 %v262
      %v295 = vunpack.c.l.b16 %v263
      %v296 = vunpack.c.l.b16 %v264
      %v297 = vunpack.c.l.b16 %v265
      %v298 = vunpack.c.l.b16 %v266
      %v299 = vunpack.c.l.b16 %v267
      %v300 = vunpack.c.l.b16 %v268
      %v301 = vpack.c.b16 %v294, %v293
      %v302 = vpack.c.b16 %v296, %v295
      %v303 = vpack.c.b16 %v298, %v297
      %v304 = vpack.c.b16 %v300, %v299
      %v325 = vunpack.c.l.b16 %v269
      %v326 = vunpack.c.l.b16 %v270
      %v327 = vunpack.c.l.b16 %v271
      %v328 = vunpack.c.l.b16 %v272
      %v329 = vunpack.c.l.b16 %v273
      %v330 = vunpack.c.l.b16 %v274
      %v331 = vunpack.c.l.b16 %v275
      %v332 = vunpack.c.l.b16 %v276
      %v333 = vunpack.c.l.b16 %v277
      %v334 = vunpack.c.l.b16 %v278
      %v335 = vunpack.c.l.b16 %v279
      %v336 = vunpack.c.l.b16 %v280
      %v337 = vunpack.c.l.b16 %v281
      %v338 = vunpack.c.l.b16 %v282
      %v339 = vunpack.c.l.b16 %v283
      %v340 = vunpack.c.l.b16 %v284
      %v341 = vpack.c.b16 %v326, %v325
      %v342 = vpack.c.b16 %v328, %v327
      %v343 = vpack.c.b16 %v330, %v329
      %v344 = vpack.c.b16 %v332, %v331
      %v345 = vpack.c.b16 %v334, %v333
      %v346 = vpack.c.b16 %v336, %v335
      %v347 = vpack.c.b16 %v338, %v337
      %v348 = vpack.c.b16 %v340, %v339
      %357 = vmatprep.subr.bf16.mxu0 0
      %358 = vmatpush1.bf16.msra.mxu0 %v341
      %359 = vmatprep.subr.bf16.mxu0 0
      %360 = vmatpush1.bf16.msra.mxu0 %v342
      %361 = vmatprep.subr.bf16.mxu0 0
      %362 = vmatpush1.bf16.msra.mxu0 %v343
      %363 = vmatprep.subr.bf16.mxu0 0
      %364 = vmatpush1.bf16.msra.mxu0 %v344
      %365 = vmatprep.subr.bf16.mxu0 0
      %366 = vmatpush1.bf16.msra.mxu0 %v345
      %367 = vmatprep.subr.bf16.mxu0 0
      %368 = vmatpush1.bf16.msra.mxu0 %v346
      %369 = vmatprep.subr.bf16.mxu0 0
      %370 = vmatpush1.bf16.msra.mxu0 %v347
      %371 = vmatprep.subr.bf16.mxu0 0
      %372 = vmatpush1.bf16.msra.mxu0 %v348
      %373 = vmatprep.subr.bf16.mxu0 0
      %374 = vmatpush1.bf16.msra.mxu0 0
      %375 = vmatprep.subr.bf16.mxu0 0
      %376 = vmatpush1.bf16.msra.mxu0 0
      %377 = vmatprep.subr.bf16.mxu0 0
      %378 = vmatpush1.bf16.msra.mxu0 0
      %379 = vmatprep.subr.bf16.mxu0 0
      %380 = vmatpush1.bf16.msra.mxu0 0
      %381 = vmatprep.subr.bf16.mxu0 0
      %382 = vmatpush1.bf16.msra.mxu0 0
      %383 = vmatprep.subr.bf16.mxu0 0
      %384 = vmatpush1.bf16.msra.mxu0 0
      %385 = vmatprep.subr.bf16.mxu0 0
      %386 = vmatpush1.bf16.msra.mxu0 0
      %387 = vmatprep.subr.bf16.mxu0 0
      %388 = vmatpush1.bf16.msra.mxu0 0
      %389 = vmatprep.mubr.bf16.mxu0 0
      %390 = vmatmul.mubr.bf16.gmra.mrb[0].mxu0 %v301
      %v391 = vpop.f32.mrb[0].mxu0
      %v392 = vadd.f32 0.0, %v391
      %v393 = vpop.f32.mrb[0].mxu0
      %v394 = vpop.f32.mrb[0].mxu0
      %v395 = vadd.f32 0.0, %v394
      %v396 = vpop.f32.mrb[0].mxu0
      %397 = vmatprep.mubr.bf16.mxu0 0
      %398 = vmatmul.mubr.bf16.gmra.mrb[0].mxu0 %v302
      %v399 = vpop.f32.mrb[0].mxu0
      %v400 = vadd.f32 0.0, %v399
      %v401 = vpop.f32.mrb[0].mxu0
      %v402 = vpop.f32.mrb[0].mxu0
      %v403 = vadd.f32 0.0, %v402
      %v404 = vpop.f32.mrb[0].mxu0
      %405 = vmatprep.mubr.bf16.mxu0 0
      %406 = vmatmul.mubr.bf16.gmra.mrb[0].mxu0 %v303
      %v407 = vpop.f32.mrb[0].mxu0
      %v408 = vadd.f32 0.0, %v407
      %v409 = vpop.f32.mrb[0].mxu0
      %v410 = vpop.f32.mrb[0].mxu0
      %v411 = vadd.f32 0.0, %v410
      %v412 = vpop.f32.mrb[0].mxu0
      %413 = vmatprep.mubr.bf16.mxu0 0
      %414 = vmatmul.mubr.bf16.gmra.mrb[0].mxu0 %v304
      %v415 = vpop.f32.mrb[0].mxu0
      %v416 = vadd.f32 0.0, %v415
      %v417 = vpop.f32.mrb[0].mxu0
      %v418 = vpop.f32.mrb[0].mxu0
      %v419 = vadd.f32 0.0, %v418
      %v420 = vpop.f32.mrb[0].mxu0
      %421 = vdwg.mxu0
      %v422 = vld [vmem:[%s3] sm:$0x1]
      %v424 = vlaneseq
      %v425 = vshrl.u32 %v424, 7
      %v426 = vsub.s32 0, %v425
      %v427 = vrot.slane %v422, %v426
      %vm429 = vcmask 523264
      %v431 = vsel %vm429, %v253, 0
      %v434 = vsel %vm429, %v254, 0
      %v437 = vsel %vm429, %v255, 0
      %v440 = vsel %vm429, %v256, 0
      %v443 = vsel %vm429, %v257, 0
      %v446 = vsel %vm429, %v258, 0
      %v449 = vsel %vm429, %v259, 0
      %v452 = vsel %vm429, %v260, 0
      %454 = vmatprep.subr.mxu0 0.0
      %455 = vmatpush1.msra.mxu0 %v392
      %456 = vmatprep.subr.mxu0 0.0
      %457 = vmatpush1.msra.mxu0 %v395
      %458 = vmatprep.subr.mxu0 0.0
      %459 = vmatpush1.msra.mxu0 %v400
      %460 = vmatprep.subr.mxu0 0.0
      %461 = vmatpush1.msra.mxu0 %v403
      %462 = vmatprep.subr.mxu0 0.0
      %463 = vmatpush1.msra.mxu0 %v408
      %464 = vmatprep.subr.mxu0 0.0
      %465 = vmatpush1.msra.mxu0 %v411
      %466 = vmatprep.subr.mxu0 0.0
      %467 = vmatpush1.msra.mxu0 %v416
      %468 = vmatprep.subr.mxu0 0.0
      %469 = vmatpush1.msra.mxu0 %v419
      %470 = vmatprep.subr.mxu0 0.0
      %471 = vmatpush1.msra.mxu0 0.0
      %472 = vmatprep.subr.mxu0 0.0
      %473 = vmatpush1.msra.mxu0 0.0
      %474 = vmatprep.subr.mxu0 0.0
      %475 = vmatpush1.msra.mxu0 0.0
      %476 = vmatprep.subr.mxu0 0.0
      %477 = vmatpush1.msra.mxu0 0.0
      %478 = vmatprep.subr.mxu0 0.0
      %479 = vmatpush1.msra.mxu0 0.0
      %480 = vmatprep.subr.mxu0 0.0
      %481 = vmatpush1.msra.mxu0 0.0
      %482 = vmatprep.subr.mxu0 0.0
      %483 = vmatpush1.msra.mxu0 0.0
      %484 = vmatprep.subr.mxu0 0.0
      %485 = vmatpush1.msra.mxu0 0.0
      %486 = vmatprep.subr.mxu0 0.0
      %487 = vmatpush1.msra.mxu0 0.0
      %488 = vmatprep.subr.mxu0 0.0
      %489 = vmatpush1.msra.mxu0 0.0
      %490 = vmatprep.subr.mxu0 0.0
      %491 = vmatpush1.msra.mxu0 0.0
      %492 = vmatprep.subr.mxu0 0.0
      %493 = vmatpush1.msra.mxu0 0.0
      %494 = vmatprep.subr.mxu0 0.0
      %495 = vmatpush1.msra.mxu0 0.0
      %496 = vmatprep.subr.mxu0 0.0
      %497 = vmatpush1.msra.mxu0 0.0
      %498 = vmatprep.subr.mxu0 0.0
      %499 = vmatpush1.msra.mxu0 0.0
      %500 = vmatprep.subr.mxu0 0.0
      %501 = vmatpush1.msra.mxu0 0.0
      %502 = vmatprep.subr.mxu0 0.0
      %503 = vmatpush1.msra.mxu0 0.0
      %504 = vmatprep.subr.mxu0 0.0
      %505 = vmatpush1.msra.mxu0 0.0
      %506 = vmatprep.subr.mxu0 0.0
      %507 = vmatpush1.msra.mxu0 0.0
      %508 = vmatprep.subr.mxu0 0.0
      %509 = vmatpush1.msra.mxu0 0.0
      %510 = vmatprep.subr.mxu0 0.0
      %511 = vmatpush1.msra.mxu0 0.0
      %512 = vmatprep.subr.mxu0 0.0
      %513 = vmatpush1.msra.mxu0 0.0
      %514 = vmatprep.subr.mxu0 0.0
      %515 = vmatpush1.msra.mxu0 0.0
      %516 = vmatprep.subr.mxu0 0.0
      %517 = vmatpush1.msra.mxu0 0.0
      %518 = vmatprep.mubr.f32.mxu0 0.0
      %519 = vmatmul.mubr.f32.gmra.mrb[0].mxu0 %v431
      %v520 = vpop.f32.mrb[0].mxu0
      %v521 = vadd.f32 %v427, %v520
      %v522 = vpop.f32.mrb[0].mxu0
      %523 = vmatprep.mubr.f32.mxu0 0.0
      %524 = vmatmul.mubr.f32.gmra.mrb[0].mxu0 %v434
      %v525 = vpop.f32.mrb[0].mxu0
      %v526 = vadd.f32 %v427, %v525
      %v527 = vpop.f32.mrb[0].mxu0
      %528 = vmatprep.mubr.f32.mxu0 0.0
      %529 = vmatmul.mubr.f32.gmra.mrb[0].mxu0 %v437
      %v530 = vpop.f32.mrb[0].mxu0
      %v531 = vadd.f32 %v427, %v530
      %v532 = vpop.f32.mrb[0].mxu0
      %533 = vmatprep.mubr.f32.mxu0 0.0
      %534 = vmatmul.mubr.f32.gmra.mrb[0].mxu0 %v440
      %v535 = vpop.f32.mrb[0].mxu0
      %v536 = vadd.f32 %v427, %v535
      %v537 = vpop.f32.mrb[0].mxu0
      %538 = vmatprep.mubr.f32.mxu0 0.0
      %539 = vmatmul.mubr.f32.gmra.mrb[0].mxu0 %v443
      %v540 = vpop.f32.mrb[0].mxu0
      %v541 = vadd.f32 %v427, %v540
      %v542 = vpop.f32.mrb[0].mxu0
      %543 = vmatprep.mubr.f32.mxu0 0.0
      %544 = vmatmul.mubr.f32.gmra.mrb[0].mxu0 %v446
      %v545 = vpop.f32.mrb[0].mxu0
      %v546 = vadd.f32 %v427, %v545
      %v547 = vpop.f32.mrb[0].mxu0
      %548 = vmatprep.mubr.f32.mxu0 0.0
      %549 = vmatmul.mubr.f32.gmra.mrb[0].mxu0 %v449
      %v550 = vpop.f32.mrb[0].mxu0
      %v551 = vadd.f32 %v427, %v550
      %v552 = vpop.f32.mrb[0].mxu0
      %553 = vmatprep.mubr.f32.mxu0 0.0
      %554 = vmatmul.mubr.f32.gmra.mrb[0].mxu0 %v452
      %v555 = vpop.f32.mrb[0].mxu0
      %v556 = vadd.f32 %v427, %v555
      %v557 = vpop.f32.mrb[0].mxu0
      %558 = vdwg.mxu0
      %v559 = vmax.f32 %v521, 0.0
      %v560 = vmax.f32 %v526, 0.0
      %v561 = vmax.f32 %v531, 0.0
      %v562 = vmax.f32 %v536, 0.0
      %v563 = vmax.f32 %v541, 0.0
      %v564 = vmax.f32 %v546, 0.0
      %v565 = vmax.f32 %v551, 0.0
      %v566 = vmax.f32 %v556, 0.0
      %v567 = vpack.c.bf16 %v560, %v559
      %v568 = vpack.c.bf16 %v562, %v561
      %v569 = vpack.c.bf16 %v564, %v563
      %v570 = vpack.c.bf16 %v566, %v565
      %v571 = vld [vmem:[%s4] sm:$0xf]
      %v572 = vld [vmem:[%s4 + $0x4] sm:$0xf]
      %v573 = vld [vmem:[%s4 + $0x8] sm:$0xf]
      %v574 = vld [vmem:[%s4 + $0xc] sm:$0xf]
      %v575 = vld [vmem:[%s4 + $0x10] sm:$0xf]
      %v576 = vld [vmem:[%s4 + $0x14] sm:$0xf]
      %v577 = vld [vmem:[%s4 + $0x18] sm:$0xf]
      %v578 = vld [vmem:[%s4 + $0x1c] sm:$0xf]
      %v579 = vld [vmem:[%s4 + $0x20] sm:$0xf]
      %v580 = vld [vmem:[%s4 + $0x24] sm:$0xf]
      %v581 = vld [vmem:[%s4 + $0x28] sm:$0xf]
      %v582 = vld [vmem:[%s4 + $0x2c] sm:$0xf]
      %v583 = vld [vmem:[%s4 + $0x30] sm:$0xf]
      %v584 = vld [vmem:[%s4 + $0x34] sm:$0xf]
      %v585 = vld [vmem:[%s4 + $0x38] sm:$0xf]
      %v586 = vld [vmem:[%s4 + $0x3c] sm:$0xf]
      %v603 = vunpack.c.l.b16 %v571
      %v604 = vunpack.c.l.b16 %v572
      %v605 = vunpack.c.l.b16 %v573
      %v606 = vunpack.c.l.b16 %v574
      %v607 = vunpack.c.l.b16 %v575
      %v608 = vunpack.c.l.b16 %v576
      %v609 = vunpack.c.l.b16 %v577
      %v610 = vunpack.c.l.b16 %v578
      %v611 = vunpack.c.l.b16 %v579
      %v612 = vunpack.c.l.b16 %v580
      %v613 = vunpack.c.l.b16 %v581
      %v614 = vunpack.c.l.b16 %v582
      %v615 = vunpack.c.l.b16 %v583
      %v616 = vunpack.c.l.b16 %v584
      %v617 = vunpack.c.l.b16 %v585
      %v618 = vunpack.c.l.b16 %v586
      %v619 = vpack.c.b16 %v604, %v603
      %v620 = vpack.c.b16 %v606, %v605
      %v621 = vpack.c.b16 %v608, %v607
      %v622 = vpack.c.b16 %v610, %v609
      %v623 = vpack.c.b16 %v612, %v611
      %v624 = vpack.c.b16 %v614, %v613
      %v625 = vpack.c.b16 %v616, %v615
      %v626 = vpack.c.b16 %v618, %v617
      %635 = vmatprep.subr.bf16.mxu0 0
      %636 = vmatpush1.bf16.msra.mxu0 %v619
      %637 = vmatprep.subr.bf16.mxu0 0
      %638 = vmatpush1.bf16.msra.mxu0 %v620
      %639 = vmatprep.subr.bf16.mxu0 0
      %640 = vmatpush1.bf16.msra.mxu0 %v621
      %641 = vmatprep.subr.bf16.mxu0 0
      %642 = vmatpush1.bf16.msra.mxu0 %v622
      %643 = vmatprep.subr.bf16.mxu0 0
      %644 = vmatpush1.bf16.msra.mxu0 %v623
      %645 = vmatprep.subr.bf16.mxu0 0
      %646 = vmatpush1.bf16.msra.mxu0 %v624
      %647 = vmatprep.subr.bf16.mxu0 0
      %648 = vmatpush1.bf16.msra.mxu0 %v625
      %649 = vmatprep.subr.bf16.mxu0 0
      %650 = vmatpush1.bf16.msra.mxu0 %v626
      %651 = vmatprep.subr.bf16.mxu0 0
      %652 = vmatpush1.bf16.msra.mxu0 0
      %653 = vmatprep.subr.bf16.mxu0 0
      %654 = vmatpush1.bf16.msra.mxu0 0
      %655 = vmatprep.subr.bf16.mxu0 0
      %656 = vmatpush1.bf16.msra.mxu0 0
      %657 = vmatprep.subr.bf16.mxu0 0
      %658 = vmatpush1.bf16.msra.mxu0 0
      %659 = vmatprep.subr.bf16.mxu0 0
      %660 = vmatpush1.bf16.msra.mxu0 0
      %661 = vmatprep.subr.bf16.mxu0 0
      %662 = vmatpush1.bf16.msra.mxu0 0
      %663 = vmatprep.subr.bf16.mxu0 0
      %664 = vmatpush1.bf16.msra.mxu0 0
      %665 = vmatprep.subr.bf16.mxu0 0
      %666 = vmatpush1.bf16.msra.mxu0 0
      %667 = vmatprep.mubr.bf16.mxu0 0
      %668 = vmatmul.mubr.bf16.gmra.mrb[0].mxu0 %v567
      %v669 = vpop.f32.mrb[0].mxu0
      %v670 = vadd.f32 0.0, %v669
      %v671 = vpop.f32.mrb[0].mxu0
      %v672 = vpop.f32.mrb[0].mxu0
      %v673 = vadd.f32 0.0, %v672
      %v674 = vpop.f32.mrb[0].mxu0
      %675 = vmatprep.mubr.bf16.mxu0 0
      %676 = vmatmul.mubr.bf16.gmra.mrb[0].mxu0 %v568
      %v677 = vpop.f32.mrb[0].mxu0
      %v678 = vadd.f32 0.0, %v677
      %v679 = vpop.f32.mrb[0].mxu0
      %v680 = vpop.f32.mrb[0].mxu0
      %v681 = vadd.f32 0.0, %v680
      %v682 = vpop.f32.mrb[0].mxu0
      %683 = vmatprep.mubr.bf16.mxu0 0
      %684 = vmatmul.mubr.bf16.gmra.mrb[0].mxu0 %v569
      %v685 = vpop.f32.mrb[0].mxu0
      %v686 = vadd.f32 0.0, %v685
      %v687 = vpop.f32.mrb[0].mxu0
      %v688 = vpop.f32.mrb[0].mxu0
      %v689 = vadd.f32 0.0, %v688
      %v690 = vpop.f32.mrb[0].mxu0
      %691 = vmatprep.mubr.bf16.mxu0 0
      %692 = vmatmul.mubr.bf16.gmra.mrb[0].mxu0 %v570
      %v693 = vpop.f32.mrb[0].mxu0
      %v694 = vadd.f32 0.0, %v693
      %v695 = vpop.f32.mrb[0].mxu0
      %v696 = vpop.f32.mrb[0].mxu0
      %v697 = vadd.f32 0.0, %v696
      %v698 = vpop.f32.mrb[0].mxu0
      %699 = vdwg.mxu0
      %v700 = vld [vmem:[%s5] sm:$0x1]
      %v702 = vlaneseq
      %v703 = vshrl.u32 %v702, 7
      %v704 = vsub.s32 0, %v703
      %v705 = vrot.slane %v700, %v704
      %707 = vmatprep.subr.mxu0 0.0
      %708 = vmatpush1.msra.mxu0 %v670
      %709 = vmatprep.subr.mxu0 0.0
      %710 = vmatpush1.msra.mxu0 %v673
      %711 = vmatprep.subr.mxu0 0.0
      %712 = vmatpush1.msra.mxu0 %v678
      %713 = vmatprep.subr.mxu0 0.0
      %714 = vmatpush1.msra.mxu0 %v681
      %715 = vmatprep.subr.mxu0 0.0
      %716 = vmatpush1.msra.mxu0 %v686
      %717 = vmatprep.subr.mxu0 0.0
      %718 = vmatpush1.msra.mxu0 %v689
      %719 = vmatprep.subr.mxu0 0.0
      %720 = vmatpush1.msra.mxu0 %v694
      %721 = vmatprep.subr.mxu0 0.0
      %722 = vmatpush1.msra.mxu0 %v697
      %723 = vmatprep.subr.mxu0 0.0
      %724 = vmatpush1.msra.mxu0 0.0
      %725 = vmatprep.subr.mxu0 0.0
      %726 = vmatpush1.msra.mxu0 0.0
      %727 = vmatprep.subr.mxu0 0.0
      %728 = vmatpush1.msra.mxu0 0.0
      %729 = vmatprep.subr.mxu0 0.0
      %730 = vmatpush1.msra.mxu0 0.0
      %731 = vmatprep.subr.mxu0 0.0
      %732 = vmatpush1.msra.mxu0 0.0
      %733 = vmatprep.subr.mxu0 0.0
      %734 = vmatpush1.msra.mxu0 0.0
      %735 = vmatprep.subr.mxu0 0.0
      %736 = vmatpush1.msra.mxu0 0.0
      %737 = vmatprep.subr.mxu0 0.0
      %738 = vmatpush1.msra.mxu0 0.0
      %739 = vmatprep.subr.mxu0 0.0
      %740 = vmatpush1.msra.mxu0 0.0
      %741 = vmatprep.subr.mxu0 0.0
      %742 = vmatpush1.msra.mxu0 0.0
      %743 = vmatprep.subr.mxu0 0.0
      %744 = vmatpush1.msra.mxu0 0.0
      %745 = vmatprep.subr.mxu0 0.0
      %746 = vmatpush1.msra.mxu0 0.0
      %747 = vmatprep.subr.mxu0 0.0
      %748 = vmatpush1.msra.mxu0 0.0
      %749 = vmatprep.subr.mxu0 0.0
      %750 = vmatpush1.msra.mxu0 0.0
      %751 = vmatprep.subr.mxu0 0.0
      %752 = vmatpush1.msra.mxu0 0.0
      %753 = vmatprep.subr.mxu0 0.0
      %754 = vmatpush1.msra.mxu0 0.0
      %755 = vmatprep.subr.mxu0 0.0
      %756 = vmatpush1.msra.mxu0 0.0
      %757 = vmatprep.subr.mxu0 0.0
      %758 = vmatpush1.msra.mxu0 0.0
      %759 = vmatprep.subr.mxu0 0.0
      %760 = vmatpush1.msra.mxu0 0.0
      %761 = vmatprep.subr.mxu0 0.0
      %762 = vmatpush1.msra.mxu0 0.0
      %763 = vmatprep.subr.mxu0 0.0
      %764 = vmatpush1.msra.mxu0 0.0
      %765 = vmatprep.subr.mxu0 0.0
      %766 = vmatpush1.msra.mxu0 0.0
      %767 = vmatprep.subr.mxu0 0.0
      %768 = vmatpush1.msra.mxu0 0.0
      %769 = vmatprep.subr.mxu0 0.0
      %770 = vmatpush1.msra.mxu0 0.0
      %771 = vmatprep.mubr.f32.mxu0 0.0
      %772 = vmatmul.mubr.f32.gmra.mrb[0].mxu0 %v431
      %v773 = vpop.f32.mrb[0].mxu0
      %v774 = vadd.f32 %v705, %v773
      %v775 = vpop.f32.mrb[0].mxu0
      %776 = vmatprep.mubr.f32.mxu0 0.0
      %777 = vmatmul.mubr.f32.gmra.mrb[0].mxu0 %v434
      %v778 = vpop.f32.mrb[0].mxu0
      %v779 = vadd.f32 %v705, %v778
      %v780 = vpop.f32.mrb[0].mxu0
      %781 = vmatprep.mubr.f32.mxu0 0.0
      %782 = vmatmul.mubr.f32.gmra.mrb[0].mxu0 %v437
      %v783 = vpop.f32.mrb[0].mxu0
      %v784 = vadd.f32 %v705, %v783
      %v785 = vpop.f32.mrb[0].mxu0
      %786 = vmatprep.mubr.f32.mxu0 0.0
      %787 = vmatmul.mubr.f32.gmra.mrb[0].mxu0 %v440
      %v788 = vpop.f32.mrb[0].mxu0
      %v789 = vadd.f32 %v705, %v788
      %v790 = vpop.f32.mrb[0].mxu0
      %791 = vmatprep.mubr.f32.mxu0 0.0
      %792 = vmatmul.mubr.f32.gmra.mrb[0].mxu0 %v443
      %v793 = vpop.f32.mrb[0].mxu0
      %v794 = vadd.f32 %v705, %v793
      %v795 = vpop.f32.mrb[0].mxu0
      %796 = vmatprep.mubr.f32.mxu0 0.0
      %797 = vmatmul.mubr.f32.gmra.mrb[0].mxu0 %v446
      %v798 = vpop.f32.mrb[0].mxu0
      %v799 = vadd.f32 %v705, %v798
      %v800 = vpop.f32.mrb[0].mxu0
      %801 = vmatprep.mubr.f32.mxu0 0.0
      %802 = vmatmul.mubr.f32.gmra.mrb[0].mxu0 %v449
      %v803 = vpop.f32.mrb[0].mxu0
      %v804 = vadd.f32 %v705, %v803
      %v805 = vpop.f32.mrb[0].mxu0
      %806 = vmatprep.mubr.f32.mxu0 0.0
      %807 = vmatmul.mubr.f32.gmra.mrb[0].mxu0 %v452
      %v808 = vpop.f32.mrb[0].mxu0
      %v809 = vadd.f32 %v705, %v808
      %v810 = vpop.f32.mrb[0].mxu0
      %811 = vdwg.mxu0
      %812 = vst [vmem:[%s251] sm:$0xff] %v774
      %813 = vst [vmem:[%s251 + $0x8] sm:$0xff] %v779
      %814 = vst [vmem:[%s251 + $0x10] sm:$0xff] %v784
      %815 = vst [vmem:[%s251 + $0x18] sm:$0xff] %v789
      %816 = vst [vmem:[%s251 + $0x20] sm:$0xff] %v794
      %817 = vst [vmem:[%s251 + $0x28] sm:$0xff] %v799
      %818 = vst [vmem:[%s251 + $0x30] sm:$0xff] %v804
      %819 = vst [vmem:[%s251 + $0x38] sm:$0xff] %v809
      %p820 = scmp.lt.s32.totalorder %s17, 1
      %s821 = scalar_select %p820, %s17, 1
      %s822 = smul.addr %s821, 8
      %s823 = smul.addr %s822, 8
      %s824 = scalar_lea.vmem %s6, %s823
      // Predicated region
      $region45: #{gnn_fused.1} parent=43 // pred_check
        %p825 = pneg %p166
      $region46: #{gnn_fused.1} parent=43 // pred_check_branch
        %827 = sbr.rel (%p825) target = $region48
      $region47: #{gnn_fused.1} parent=43 // pred_region
        _
      $region48: #{gnn_fused.1} parent=43 // pred_fallthru
        _
    $region44: #{gnn_fused.1} parent=5 // pred_fallthru
      _
    %p828 = scmp.le.s32.totalorder 2, %s12
    // Predicated region
    $region49: #{gnn_fused.1} parent=5 // pred_check
      %p829 = pneg %p828
    $region50: #{gnn_fused.1} parent=5 // pred_check_branch
      %831 = sbr.rel (%p829) target = $region52
    $region51: #{gnn_fused.1} parent=5 // pred_region
      %s832 = ssub.s32 %s12, 2
      // Predicated region
      $region53: #{gnn_fused.1} parent=51 // pred_check
        %p833 = pneg %p172
      $region54: #{gnn_fused.1} parent=51 // pred_check_branch
        %835 = sbr.rel (%p833) target = $region56
      $region55: #{gnn_fused.1} parent=51 // pred_region
        %p836 = scmp.lt.s32.totalorder %s18, 1
        %s837 = scalar_select %p836, %s18, 1
        %s838 = smul.addr %s837, 8
        %s839 = smul.addr %s838, 8
        %s840 = scalar_lea.vmem %s6, %s839
      $region56: #{gnn_fused.1} parent=51 // pred_fallthru
        _
    $region52: #{gnn_fused.1} parent=5 // pred_fallthru
      _
  $region6: #{gnn_fused.1} parent=0 // loop_footer
    %s16 = sadd.s32 1, %s12
  $region7: #{gnn_fused.1} parent=0 // loop_footer_branch
    %11 = sbr.rel target = $region3
  $region8: #{gnn_fused.1} parent=0 // loop_exit
    _

</llo_original>
